<compile_context>
chip_gen: v6e
topology: v6e:2x2x1
jax: 0.10.0
libtpu: 0.0.40
codegen_flags: <defaults>
</compile_context>

<pallas_src>
import jax
import jax.numpy as jnp
from jax.experimental import pallas as pl
from jax.experimental.pallas import tpu as pltpu


_MAX_LANES = 4096              # widest lane slab considered (multiple of 128)
_FALLBACK_LANES = 512          # lane width for the ragged (aligned-prefix) path
_SMALL_INPUT_BYTES = 256 << 10 # below this: plain func(x), no kernel launch
_MIN_BLOCKS = 4                # target minimum grid steps for pipelining/megacore


def _sublane_multiple(dtype) -> int:
    """Minimum sublane tiling multiple for a dtype (packing-aware)."""
    itemsize = jnp.dtype(dtype).itemsize
    if itemsize >= 4:
        return 8
    if itemsize == 2:
        return 16
    return 32


def _target_block_bytes() -> int:
    """Per-buffer block-byte target, tuned per TPU generation."""
    try:
        kind = jax.devices()[0].device_kind.lower()
    except Exception:
        return 2 << 20
    if "v7" in kind:
        return 6 << 20   # 3.2 TB/s HBM: bigger blocks to hide per-step overhead
    if "v6" in kind:
        return 4 << 20   # 128 MiB VMEM: free headroom, ~1-3% win
    return 2 << 20       # v5e / unknown: 2 MiB already >= ~85% of roofline


def _make_lambda_kernel(func):
    def kernel(x_ref, o_ref):
        # Apply the wrapped elementwise function on the current VMEM tile.
        # Note for kernel users: on v7x, transcendental-heavy funcs can make
        # the single EUP the saturating slot; prefer pl.reciprocal(approx=True)
        # and bf16 compute inside `func` where accuracy allows.
        o_ref[...] = func(x_ref[...]).astype(o_ref.dtype)
    return kernel


def _launch_2d(func, x2d, out_dtype, sub, itemsize):
    """Run the elementwise kernel over a lane-dense (rows, lanes) slab."""
    rows, lanes = x2d.shape
    bytes_per_row = lanes * itemsize

    # Block rows from the per-buffer byte budget (sublane-aligned).
    block_rows = max(sub, (_target_block_bytes() // bytes_per_row) // sub * sub)

    # Never collapse to a single (unpipelined, single-core) grid step: aim for
    # >= _MIN_BLOCKS blocks so input DMA / compute / output DMA overlap and
    # both v7x TensorCores get whole blocks.
    if rows >= _MIN_BLOCKS * sub:
        block_rows = min(block_rows, max(sub, (rows // _MIN_BLOCKS) // sub * sub))
    elif rows >= 2 * sub:
        block_rows = min(block_rows, max(sub, (rows // 2) // sub * sub))
    if block_rows >= rows:
        block_rows = rows  # tiny slab: single full-extent block is still legal

    grid_rows = pl.cdiv(rows, block_rows)
    block_bytes = block_rows * lanes * itemsize
    # Double-buffered in + out (~4x block) plus compiler scratch headroom;
    # cap at 48 MiB to stay safe on v7x (64 MiB physical VMEM per TC).
    vmem_limit = int(min(max(5 * block_bytes + (4 << 20), 32 << 20), 48 << 20))

    return pl.pallas_call(
        _make_lambda_kernel(func),
        out_shape=jax.ShapeDtypeStruct((rows, lanes), out_dtype),
        grid=(grid_rows,),
        in_specs=[pl.BlockSpec((block_rows, lanes), lambda i: (i, 0))],
        out_specs=pl.BlockSpec((block_rows, lanes), lambda i: (i, 0)),
        compiler_params=pltpu.CompilerParams(
            # "parallel" lets the runtime shard the row axis across TCs on
            # megacore parts; harmless elsewhere.
            dimension_semantics=("parallel",),
            vmem_limit_bytes=vmem_limit),
    )(x2d)


def lambda_pallas(func, x):
    """Pallas equivalent of Lambda(func).forward(x) for ELEMENTWISE `func`."""
    orig_shape = x.shape
    n = x.size

    # Match PyTorch Lambda semantics: output dtype is whatever func returns.
    out_aval = jax.eval_shape(func, jax.ShapeDtypeStruct(x.shape, x.dtype))
    if out_aval.shape != orig_shape:
        # TODO(synk): non-elementwise / shape-changing funcs have no generic
        # tile decomposition; fall back to plain JAX for those.
        return func(x)
    out_dtype = out_aval.dtype

    itemsize = max(jnp.dtype(x.dtype).itemsize, jnp.dtype(out_dtype).itemsize)

    # Small-input fast path: launch cost + reshapes dominate below ~256 KiB;
    # XLA's fused elementwise loop is already at roofline there.
    if n * itemsize <= _SMALL_INPUT_BYTES:
        return func(x)

    sub = max(_sublane_multiple(x.dtype), _sublane_multiple(out_dtype))

    # ---- choose a lane-dense 2-D layout [rows, lanes] ---------------------
    lanes = 0
    for cand in range(_MAX_LANES, 0, -128):   # widest multiple of 128 dividing n
        if n % cand == 0:
            lanes = cand
            break

    flat = x.reshape(-1)

    if lanes:
        out2d = _launch_2d(func, flat.reshape(n // lanes, lanes),
                           out_dtype, sub, itemsize)
        return out2d.reshape(orig_shape)

    # Ragged path (n not a multiple of 128): run the kernel on the aligned
    # prefix only and handle the short tail (< _FALLBACK_LANES elements) with
    # plain JAX.  This avoids the full-array pad + trailing-slice passes of a
    # pad-based fallback (~3x HBM traffic).
    lanes = _FALLBACK_LANES
    n_main = (n // lanes) * lanes   # > 0: fast path already excluded tiny n
    main2d = _launch_2d(func, flat[:n_main].reshape(n_main // lanes, lanes),
                        out_dtype, sub, itemsize)
    tail_out = func(flat[n_main:]).astype(out_dtype)
    return jnp.concatenate([main2d.reshape(-1), tail_out]).reshape(orig_shape)


if __name__ == "__main__":
    key = jax.random.PRNGKey(0)

    def silu(t):
        return t * jax.nn.sigmoid(t)

    # 1) Module-sized small input (NCHW 2,4,16,16): takes the small-input
    #    fast path (plain func), matching Lambda.forward semantics exactly.
    x_small = jax.random.normal(key, (2, 4, 16, 16), dtype=jnp.float32)
    out_small = jax.block_until_ready(lambda_pallas(silu, x_small))
    assert out_small.shape == x_small.shape
    assert jnp.allclose(out_small, silu(x_small), atol=1e-6, rtol=1e-6)

    # 2) Larger input: exercises the multi-block Pallas path (>= 4 grid steps).
    x_big = jax.random.normal(key, (8, 4, 128, 128), dtype=jnp.float32)
    out_big = jax.block_until_ready(lambda_pallas(silu, x_big))
    assert out_big.shape == x_big.shape and out_big.dtype == x_big.dtype
    assert jnp.allclose(out_big, silu(x_big), atol=1e-6, rtol=1e-6)

    # 3) Ragged size (not a multiple of 128): aligned-prefix kernel + tiny tail.
    x_rag = jax.random.normal(key, (131109,), dtype=jnp.float32)
    out_rag = jax.block_until_ready(lambda_pallas(lambda t: 2.0 * t + 1.0, x_rag))
    assert out_rag.shape == x_rag.shape
    assert jnp.allclose(out_rag, 2.0 * x_rag + 1.0, atol=1e-6, rtol=1e-6)

    print("KERNEL_OK")
</pallas_src>

<mosaic_0001>
module attributes {stable_mosaic.version = 11 : i64} {
  func.func @kernel(%arg0: i32, %arg1: memref<32x4096xf32, #tpu.memory_space<vmem>>, %arg2: memref<32x4096xf32, #tpu.memory_space<vmem>>) attributes {dimension_semantics = [#tpu.dimension_semantics<parallel>], iteration_bounds = array<i64: 4>, scalar_prefetch = 0 : i64, scratch_operands = 0 : i64, tpu.core_type = #tpu.core_type<tc>, window_params = [{transform_indices = @transform_0, window_bounds = array<i64: 32, 4096>}, {transform_indices = @transform_1, window_bounds = array<i64: 32, 4096>}]} {
    %c0 = arith.constant 0 : index
    %c0_0 = arith.constant 0 : index
    %0 = vector.load %arg1[%c0, %c0_0] : memref<32x4096xf32, #tpu.memory_space<vmem>>, vector<32x4096xf32>
    %1 = arith.negf %0 : vector<32x4096xf32>
    %2 = math.exp %1 : vector<32x4096xf32>
    %cst = arith.constant 1.000000e+00 : f32
    %3 = vector.broadcast %cst : f32 to vector<32x4096xf32>
    %4 = arith.addf %3, %2 : vector<32x4096xf32>
    %5 = arith.divf %3, %4 : vector<32x4096xf32>
    %6 = arith.mulf %0, %5 : vector<32x4096xf32>
    %c0_1 = arith.constant 0 : index
    %c0_2 = arith.constant 0 : index
    %7 = vector.load %arg2[%c0_1, %c0_2] : memref<32x4096xf32, #tpu.memory_space<vmem>>, vector<32x4096xf32>
    tpu.vector_store %arg2[%c0_1, %c0_2], %6 {strides = array<i32>} : memref<32x4096xf32, #tpu.memory_space<vmem>>, vector<32x4096xf32>,
    return
  }
  func.func @transform_0(%arg0: i32) -> (i32, i32) {
    %c0_i32 = arith.constant 0 : i32
    %c0_i32_0 = arith.constant 0 : i32
    return %arg0, %c0_i32 : i32, i32
  }
  func.func @transform_1(%arg0: i32) -> (i32, i32) {
    %c0_i32 = arith.constant 0 : i32
    %c0_i32_0 = arith.constant 0 : i32
    return %arg0, %c0_i32 : i32, i32
  }
}

</mosaic_0001>

<llo_original>
// kernel: tpu_custom_call.1
$region0: #{tpu_custom_call.1}
  #allocation0 [shape = 'u32[]', space=smem, size = 0x4, offset = 0x4, fixed_abs, tag = 'smem constant byte address 0x4 - core index']
  #allocation1 [shape = 'u32[144,128]{1,0:T(1,128)}', space=vmem, size = 0x12000, scoped, tag = 'internal scratch']
  %s0 = inlined_call_operand.hbm [shape: f32[128,4096], index: 0, kind: input, shape index: {}]
  %s1 = inlined_call_operand.hbm [shape: f32[128,4096], index: 1, kind: output, shape index: {}]
  %s2 = sld [smem:[#allocation0]]
  $region41: #{tpu_custom_call.1} parent=0
    _
  %s4 = ssub.s32 1, %s2
  %s5 = scalar_select 0, %s4, %s2
  $region1: #{tpu_custom_call.1} parent=0
    #allocation2 [shape = 'u8[1048576]{0}', space=vmem, size = 0x100000, scoped, tag = 'input window, operand 0']
    #allocation3 [shape = 's32[2]{0}', space=sflag, size = 0x8, scoped, tag = 'scoped memory for tpu_custom_call.1']
    #allocation4 [shape = 's32[2]{0}', space=sflag, size = 0x8, scoped, tag = 'scoped memory for tpu_custom_call.1']
    #allocation5 [shape = 'u8[1048576]{0}', space=vmem, size = 0x100000, scoped, tag = 'output window, operand 0']
    %6 = vsyncpa [#allocation3], 0
    %s7 = scalar_lea.sflag [#allocation3], 1
    %8 = vsyncpa %s7, 0
    %9 = vsyncpa [#allocation4], 0
    %s10 = scalar_lea.sflag [#allocation4], 1
    %11 = vsyncpa %s10, 0
    loop: start=0, step=1, limit=6
    $region2: #{tpu_custom_call.1} parent=1 // loop_pre_header
      _
    $region3: #{tpu_custom_call.1} parent=1 // loop_header
      %s13 = sphi 0, %s17
      %p14 = scmp.ge.s32.totalorder %s13, 6
      %s23 = sphi 0, %s25
      %s26 = sphi 0, %s23
      %s27 = sphi 0, %s26
      %s43 = sphi 0, %s27
      %s49 = sphi 0, %s51
      %s52 = sphi 0, %s49
      %s53 = sphi 0, %s52
      %s69 = sphi 0, %s53
    $region4: #{tpu_custom_call.1} parent=1 // loop_header_branch
      %16 = sbr.rel (%p14) target = $region8
    $region5: #{tpu_custom_call.1} parent=1 // loop_body
      %s18 = ssub.s32 %s13, 1
      %s19 = ssub.s32 %s13, 2
      %s20 = sadd.s32 %s13, 1
      %s21 = ssub.s32 %s13, %s20
      %p22 = scmp.eq.s32.totalorder %s21, 0
      %s24 = sadd.s32 %s23, 1
      %s25 = scalar_select %p22, %s23, %s24
      %p28 = pneg %p22
      %p29 = scmp.eq.s32.totalorder %s13, 3
      %p30 = por %p28, %p29
      %p31 = scmp.ne.s32.totalorder %s23, %s26
      %p32 = scmp.eq.s32.totalorder %s13, 0
      %p33 = por %p31, %p32
      %p34 = scmp.ne.s32.totalorder %s23, %s26
      %p35 = scmp.eq.s32.totalorder %s18, 3
      %p36 = por %p34, %p35
      %p37 = scmp.ne.s32.totalorder %s26, %s27
      %p38 = scmp.eq.s32.totalorder %s18, 0
      %p39 = por %p37, %p38
      %p40 = scmp.ne.s32.totalorder %s26, %s27
      %p41 = scmp.eq.s32.totalorder %s19, 3
      %p42 = por %p40, %p41
      %p44 = scmp.ne.s32.totalorder %s27, %s43
      %p45 = scmp.eq.s32.totalorder %s19, 0
      %p46 = por %p44, %p45
      %s47 = ssub.s32 %s13, %s20
      %p48 = scmp.eq.s32.totalorder %s47, 0
      %s50 = sadd.s32 %s49, 1
      %s51 = scalar_select %p48, %s49, %s50
      %p54 = pneg %p48
      %p55 = scmp.eq.s32.totalorder %s13, 3
      %p56 = por %p54, %p55
      %p57 = scmp.ne.s32.totalorder %s49, %s52
      %p58 = scmp.eq.s32.totalorder %s13, 0
      %p59 = por %p57, %p58
      %p60 = scmp.ne.s32.totalorder %s49, %s52
      %p61 = scmp.eq.s32.totalorder %s18, 3
      %p62 = por %p60, %p61
      %p63 = scmp.ne.s32.totalorder %s52, %s53
      %p64 = scmp.eq.s32.totalorder %s18, 0
      %p65 = por %p63, %p64
      %p66 = scmp.ne.s32.totalorder %s52, %s53
      %p67 = scmp.eq.s32.totalorder %s19, 3
      %p68 = por %p66, %p67
      %p70 = scmp.ne.s32.totalorder %s53, %s69
      %p71 = scmp.eq.s32.totalorder %s19, 0
      %p72 = por %p70, %p71
      %p73 = scmp.le.s32.totalorder 1, %s13
      %p74 = scmp.lt.s32.totalorder %s13, 5
      %p75 = pnand %p73, %p74
      %p76 = pneg %p75
      // Predicated region
      $region9: #{tpu_custom_call.1} parent=5 // pred_check
        _
      $region10: #{tpu_custom_call.1} parent=5 // pred_check_branch
        %78 = sbr.rel (%p75) target = $region12
      $region11: #{tpu_custom_call.1} parent=5 // pred_region
        %s79 = ssub.s32 %s13, 1
      $region12: #{tpu_custom_call.1} parent=5 // pred_fallthru
        _
      %p80 = scmp.lt.s32.totalorder %s13, 4
      // Predicated region
      $region13: #{tpu_custom_call.1} parent=5 // pred_check
        %p81 = pneg %p80
      $region14: #{tpu_custom_call.1} parent=5 // pred_check_branch
        %83 = sbr.rel (%p81) target = $region16
      $region15: #{tpu_custom_call.1} parent=5 // pred_region
        // Predicated region
        $region17: #{tpu_custom_call.1} parent=15 // pred_check
          %p84 = pneg %p33
        $region18: #{tpu_custom_call.1} parent=15 // pred_check_branch
          %86 = sbr.rel (%p84) target = $region20
        $region19: #{tpu_custom_call.1} parent=15 // pred_region
          %s87 = sand.u32 %s23, 1
          %s88 = scalar_lea.sflag [#allocation3], %s87
          %s89 = sand.u32 %s23, 1
          %s90 = smul.addr %s89, 1024
          %s91 = scalar_lea.vmem [#allocation2], %s90
          %s92 = smul.u32 4, %s13
          %s94 = ssub.s32 16384, 16384
          %95 = vsyncadd %s88, %s94
          %s96 = smul.addr %s92, 32
          %s97 = smul.addr %s96, 128
          %s98 = scalar_lea.hbm %s0, %s97
          %s99 = sshll.u32 %s91, 4
          %s100 = int_to_ptr.vmem [resolvable:$true] %s99
          %105 = dma.hbm_to_vmem [thread:$0]  %s98, 16384, %s100, %s88, 4096, 4096, 256
        $region20: #{tpu_custom_call.1} parent=15 // pred_fallthru
          _
      $region16: #{tpu_custom_call.1} parent=5 // pred_fallthru
        _
      %p106 = scmp.le.s32.totalorder 1, %s13
      %p107 = scmp.lt.s32.totalorder %s13, 5
      %p108 = pnand %p106, %p107
      %p109 = pneg %p108
      // Predicated region
      $region21: #{tpu_custom_call.1} parent=5 // pred_check
        _
      $region22: #{tpu_custom_call.1} parent=5 // pred_check_branch
        %111 = sbr.rel (%p108) target = $region24
      $region23: #{tpu_custom_call.1} parent=5 // pred_region
        %s112 = ssub.s32 %s13, 1
        %s113 = sand.u32 %s26, 1
        %s114 = scalar_lea.sflag [#allocation3], %s113
        %s115 = sand.u32 %s26, 1
        %s116 = smul.addr %s115, 1024
        %s117 = scalar_lea.vmem [#allocation2], %s116
        // Predicated region
        $region25: #{tpu_custom_call.1} parent=23 // pred_check
          %p118 = pneg %p39
        $region26: #{tpu_custom_call.1} parent=23 // pred_check_branch
          %120 = sbr.rel (%p118) target = $region28
        $region27: #{tpu_custom_call.1} parent=23 // pred_region
          %121 = dma.done %s114, 16384
        $region28: #{tpu_custom_call.1} parent=23 // pred_fallthru
          _
        %s122 = sand.u32 %s26, 1
        %s123 = scalar_lea.sflag [#allocation3], %s122
        %s124 = sand.u32 %s26, 1
        %s125 = smul.addr %s124, 1024
        %s126 = scalar_lea.vmem [#allocation2], %s125
        %p127 = pneg %p39
        %p128 = pneg %p36
        %p129 = pneg %p65
        %p130 = pneg %p62
        %s131 = sand.u32 %s52, 1
        %s132 = scalar_lea.sflag [#allocation4], %s131
        %s133 = sand.u32 %s52, 1
        %s134 = smul.addr %s133, 1024
        %s135 = scalar_lea.vmem [#allocation5], %s134
        %s136 = smul.u32 4, %s18
        %s137 = smul.u32 4, %s18
        %v138 = vld [vmem:[%s117] sm:$0xff]
        %v139 = vld [vmem:[%s117 + $0x8] sm:$0xff]
        %v140 = vld [vmem:[%s117 + $0x10] sm:$0xff]
        %v141 = vld [vmem:[%s117 + $0x18] sm:$0xff]
        %v142 = vld [vmem:[%s117 + $0x20] sm:$0xff]
        %v143 = vld [vmem:[%s117 + $0x28] sm:$0xff]
        %v144 = vld [vmem:[%s117 + $0x30] sm:$0xff]
        %v145 = vld [vmem:[%s117 + $0x38] sm:$0xff]
        %v146 = vld [vmem:[%s117 + $0x40] sm:$0xff]
        %v147 = vld [vmem:[%s117 + $0x48] sm:$0xff]
        %v148 = vld [vmem:[%s117 + $0x50] sm:$0xff]
        %v149 = vld [vmem:[%s117 + $0x58] sm:$0xff]
        %v150 = vld [vmem:[%s117 + $0x60] sm:$0xff]
        %v151 = vld [vmem:[%s117 + $0x68] sm:$0xff]
        %v152 = vld [vmem:[%s117 + $0x70] sm:$0xff]
        %v153 = vld [vmem:[%s117 + $0x78] sm:$0xff]
        %v154 = vld [vmem:[%s117 + $0x80] sm:$0xff]
        %v155 = vld [vmem:[%s117 + $0x88] sm:$0xff]
        %v156 = vld [vmem:[%s117 + $0x90] sm:$0xff]
        %v157 = vld [vmem:[%s117 + $0x98] sm:$0xff]
        %v158 = vld [vmem:[%s117 + $0xa0] sm:$0xff]
        %v159 = vld [vmem:[%s117 + $0xa8] sm:$0xff]
        %v160 = vld [vmem:[%s117 + $0xb0] sm:$0xff]
        %v161 = vld [vmem:[%s117 + $0xb8] sm:$0xff]
        %v162 = vld [vmem:[%s117 + $0xc0] sm:$0xff]
        %v163 = vld [vmem:[%s117 + $0xc8] sm:$0xff]
        %v164 = vld [vmem:[%s117 + $0xd0] sm:$0xff]
        %v165 = vld [vmem:[%s117 + $0xd8] sm:$0xff]
        %v166 = vld [vmem:[%s117 + $0xe0] sm:$0xff]
        %v167 = vld [vmem:[%s117 + $0xe8] sm:$0xff]
        %v168 = vld [vmem:[%s117 + $0xf0] sm:$0xff]
        %v169 = vld [vmem:[%s117 + $0xf8] sm:$0xff]
        %v170 = vld [vmem:[%s117 + $0x100] sm:$0xff]
        %v171 = vld [vmem:[%s117 + $0x108] sm:$0xff]
        %v172 = vld [vmem:[%s117 + $0x110] sm:$0xff]
        %v173 = vld [vmem:[%s117 + $0x118] sm:$0xff]
        %v174 = vld [vmem:[%s117 + $0x120] sm:$0xff]
        %v175 = vld [vmem:[%s117 + $0x128] sm:$0xff]
        %v176 = vld [vmem:[%s117 + $0x130] sm:$0xff]
        %v177 = vld [vmem:[%s117 + $0x138] sm:$0xff]
        %v178 = vld [vmem:[%s117 + $0x140] sm:$0xff]
        %v179 = vld [vmem:[%s117 + $0x148] sm:$0xff]
        %v180 = vld [vmem:[%s117 + $0x150] sm:$0xff]
        %v181 = vld [vmem:[%s117 + $0x158] sm:$0xff]
        %v182 = vld [vmem:[%s117 + $0x160] sm:$0xff]
        %v183 = vld [vmem:[%s117 + $0x168] sm:$0xff]
        %v184 = vld [vmem:[%s117 + $0x170] sm:$0xff]
        %v185 = vld [vmem:[%s117 + $0x178] sm:$0xff]
        %v186 = vld [vmem:[%s117 + $0x180] sm:$0xff]
        %v187 = vld [vmem:[%s117 + $0x188] sm:$0xff]
        %v188 = vld [vmem:[%s117 + $0x190] sm:$0xff]
        %v189 = vld [vmem:[%s117 + $0x198] sm:$0xff]
        %v190 = vld [vmem:[%s117 + $0x1a0] sm:$0xff]
        %v191 = vld [vmem:[%s117 + $0x1a8] sm:$0xff]
        %v192 = vld [vmem:[%s117 + $0x1b0] sm:$0xff]
        %v193 = vld [vmem:[%s117 + $0x1b8] sm:$0xff]
        %v194 = vld [vmem:[%s117 + $0x1c0] sm:$0xff]
        %v195 = vld [vmem:[%s117 + $0x1c8] sm:$0xff]
        %v196 = vld [vmem:[%s117 + $0x1d0] sm:$0xff]
        %v197 = vld [vmem:[%s117 + $0x1d8] sm:$0xff]
        %v198 = vld [vmem:[%s117 + $0x1e0] sm:$0xff]
        %v199 = vld [vmem:[%s117 + $0x1e8] sm:$0xff]
        %v200 = vld [vmem:[%s117 + $0x1f0] sm:$0xff]
        %v201 = vld [vmem:[%s117 + $0x1f8] sm:$0xff]
        %v202 = vld [vmem:[%s117 + $0x200] sm:$0xff]
        %v203 = vld [vmem:[%s117 + $0x208] sm:$0xff]
        %v204 = vld [vmem:[%s117 + $0x210] sm:$0xff]
        %v205 = vld [vmem:[%s117 + $0x218] sm:$0xff]
        %v206 = vld [vmem:[%s117 + $0x220] sm:$0xff]
        %v207 = vld [vmem:[%s117 + $0x228] sm:$0xff]
        %v208 = vld [vmem:[%s117 + $0x230] sm:$0xff]
        %v209 = vld [vmem:[%s117 + $0x238] sm:$0xff]
        %v210 = vld [vmem:[%s117 + $0x240] sm:$0xff]
        %v211 = vld [vmem:[%s117 + $0x248] sm:$0xff]
        %v212 = vld [vmem:[%s117 + $0x250] sm:$0xff]
        %v213 = vld [vmem:[%s117 + $0x258] sm:$0xff]
        %v214 = vld [vmem:[%s117 + $0x260] sm:$0xff]
        %v215 = vld [vmem:[%s117 + $0x268] sm:$0xff]
        %v216 = vld [vmem:[%s117 + $0x270] sm:$0xff]
        %v217 = vld [vmem:[%s117 + $0x278] sm:$0xff]
        %v218 = vld [vmem:[%s117 + $0x280] sm:$0xff]
        %v219 = vld [vmem:[%s117 + $0x288] sm:$0xff]
        %v220 = vld [vmem:[%s117 + $0x290] sm:$0xff]
        %v221 = vld [vmem:[%s117 + $0x298] sm:$0xff]
        %v222 = vld [vmem:[%s117 + $0x2a0] sm:$0xff]
        %v223 = vld [vmem:[%s117 + $0x2a8] sm:$0xff]
        %v224 = vld [vmem:[%s117 + $0x2b0] sm:$0xff]
        %v225 = vld [vmem:[%s117 + $0x2b8] sm:$0xff]
        %v226 = vld [vmem:[%s117 + $0x2c0] sm:$0xff]
        %v227 = vld [vmem:[%s117 + $0x2c8] sm:$0xff]
        %v228 = vld [vmem:[%s117 + $0x2d0] sm:$0xff]
        %v229 = vld [vmem:[%s117 + $0x2d8] sm:$0xff]
        %v230 = vld [vmem:[%s117 + $0x2e0] sm:$0xff]
        %v231 = vld [vmem:[%s117 + $0x2e8] sm:$0xff]
        %v232 = vld [vmem:[%s117 + $0x2f0] sm:$0xff]
        %v233 = vld [vmem:[%s117 + $0x2f8] sm:$0xff]
        %v234 = vld [vmem:[%s117 + $0x300] sm:$0xff]
        %v235 = vld [vmem:[%s117 + $0x308] sm:$0xff]
        %v236 = vld [vmem:[%s117 + $0x310] sm:$0xff]
        %v237 = vld [vmem:[%s117 + $0x318] sm:$0xff]
        %v238 = vld [vmem:[%s117 + $0x320] sm:$0xff]
        %v239 = vld [vmem:[%s117 + $0x328] sm:$0xff]
        %v240 = vld [vmem:[%s117 + $0x330] sm:$0xff]
        %v241 = vld [vmem:[%s117 + $0x338] sm:$0xff]
        %v242 = vld [vmem:[%s117 + $0x340] sm:$0xff]
        %v243 = vld [vmem:[%s117 + $0x348] sm:$0xff]
        %v244 = vld [vmem:[%s117 + $0x350] sm:$0xff]
        %v245 = vld [vmem:[%s117 + $0x358] sm:$0xff]
        %v246 = vld [vmem:[%s117 + $0x360] sm:$0xff]
        %v247 = vld [vmem:[%s117 + $0x368] sm:$0xff]
        %v248 = vld [vmem:[%s117 + $0x370] sm:$0xff]
        %v249 = vld [vmem:[%s117 + $0x378] sm:$0xff]
        %v250 = vld [vmem:[%s117 + $0x380] sm:$0xff]
        %v251 = vld [vmem:[%s117 + $0x388] sm:$0xff]
        %v252 = vld [vmem:[%s117 + $0x390] sm:$0xff]
        %v253 = vld [vmem:[%s117 + $0x398] sm:$0xff]
        %v254 = vld [vmem:[%s117 + $0x3a0] sm:$0xff]
        %v255 = vld [vmem:[%s117 + $0x3a8] sm:$0xff]
        %v256 = vld [vmem:[%s117 + $0x3b0] sm:$0xff]
        %v257 = vld [vmem:[%s117 + $0x3b8] sm:$0xff]
        %v258 = vld [vmem:[%s117 + $0x3c0] sm:$0xff]
        %v259 = vld [vmem:[%s117 + $0x3c8] sm:$0xff]
        %v260 = vld [vmem:[%s117 + $0x3d0] sm:$0xff]
        %v261 = vld [vmem:[%s117 + $0x3d8] sm:$0xff]
        %v262 = vld [vmem:[%s117 + $0x3e0] sm:$0xff]
        %v263 = vld [vmem:[%s117 + $0x3e8] sm:$0xff]
        %v264 = vld [vmem:[%s117 + $0x3f0] sm:$0xff]
        %v265 = vld [vmem:[%s117 + $0x3f8] sm:$0xff]
        %v266 = vxor.u32 %v138, 2147483648
        %v267 = vxor.u32 %v139, 2147483648
        %v268 = vxor.u32 %v140, 2147483648
        %v269 = vxor.u32 %v141, 2147483648
        %v270 = vxor.u32 %v142, 2147483648
        %v271 = vxor.u32 %v143, 2147483648
        %v272 = vxor.u32 %v144, 2147483648
        %v273 = vxor.u32 %v145, 2147483648
        %v274 = vxor.u32 %v146, 2147483648
        %v275 = vxor.u32 %v147, 2147483648
        %v276 = vxor.u32 %v148, 2147483648
        %v277 = vxor.u32 %v149, 2147483648
        %v278 = vxor.u32 %v150, 2147483648
        %v279 = vxor.u32 %v151, 2147483648
        %v280 = vxor.u32 %v152, 2147483648
        %v281 = vxor.u32 %v153, 2147483648
        %v282 = vxor.u32 %v154, 2147483648
        %v283 = vxor.u32 %v155, 2147483648
        %v284 = vxor.u32 %v156, 2147483648
        %v285 = vxor.u32 %v157, 2147483648
        %v286 = vxor.u32 %v158, 2147483648
        %v287 = vxor.u32 %v159, 2147483648
        %v288 = vxor.u32 %v160, 2147483648
        %v289 = vxor.u32 %v161, 2147483648
        %v290 = vxor.u32 %v162, 2147483648
        %v291 = vxor.u32 %v163, 2147483648
        %v292 = vxor.u32 %v164, 2147483648
        %v293 = vxor.u32 %v165, 2147483648
        %v294 = vxor.u32 %v166, 2147483648
        %v295 = vxor.u32 %v167, 2147483648
        %v296 = vxor.u32 %v168, 2147483648
        %v297 = vxor.u32 %v169, 2147483648
        %v298 = vxor.u32 %v170, 2147483648
        %v299 = vxor.u32 %v171, 2147483648
        %v300 = vxor.u32 %v172, 2147483648
        %v301 = vxor.u32 %v173, 2147483648
        %v302 = vxor.u32 %v174, 2147483648
        %v303 = vxor.u32 %v175, 2147483648
        %v304 = vxor.u32 %v176, 2147483648
        %v305 = vxor.u32 %v177, 2147483648
        %v306 = vxor.u32 %v178, 2147483648
        %v307 = vxor.u32 %v179, 2147483648
        %v308 = vxor.u32 %v180, 2147483648
        %v309 = vxor.u32 %v181, 2147483648
        %v310 = vxor.u32 %v182, 2147483648
        %v311 = vxor.u32 %v183, 2147483648
        %v312 = vxor.u32 %v184, 2147483648
        %v313 = vxor.u32 %v185, 2147483648
        %v314 = vxor.u32 %v186, 2147483648
        %v315 = vxor.u32 %v187, 2147483648
        %v316 = vxor.u32 %v188, 2147483648
        %v317 = vxor.u32 %v189, 2147483648
        %v318 = vxor.u32 %v190, 2147483648
        %v319 = vxor.u32 %v191, 2147483648
        %v320 = vxor.u32 %v192, 2147483648
        %v321 = vxor.u32 %v193, 2147483648
        %v322 = vxor.u32 %v194, 2147483648
        %v323 = vxor.u32 %v195, 2147483648
        %v324 = vxor.u32 %v196, 2147483648
        %v325 = vxor.u32 %v197, 2147483648
        %v326 = vxor.u32 %v198, 2147483648
        %v327 = vxor.u32 %v199, 2147483648
        %v328 = vxor.u32 %v200, 2147483648
        %v329 = vxor.u32 %v201, 2147483648
        %v330 = vxor.u32 %v202, 2147483648
        %v331 = vxor.u32 %v203, 2147483648
        %v332 = vxor.u32 %v204, 2147483648
        %v333 = vxor.u32 %v205, 2147483648
        %v334 = vxor.u32 %v206, 2147483648
        %v335 = vxor.u32 %v207, 2147483648
        %v336 = vxor.u32 %v208, 2147483648
        %v337 = vxor.u32 %v209, 2147483648
        %v338 = vxor.u32 %v210, 2147483648
        %v339 = vxor.u32 %v211, 2147483648
        %v340 = vxor.u32 %v212, 2147483648
        %v341 = vxor.u32 %v213, 2147483648
        %v342 = vxor.u32 %v214, 2147483648
        %v343 = vxor.u32 %v215, 2147483648
        %v344 = vxor.u32 %v216, 2147483648
        %v345 = vxor.u32 %v217, 2147483648
        %v346 = vxor.u32 %v218, 2147483648
        %v347 = vxor.u32 %v219, 2147483648
        %v348 = vxor.u32 %v220, 2147483648
        %v349 = vxor.u32 %v221, 2147483648
        %v350 = vxor.u32 %v222, 2147483648
        %v351 = vxor.u32 %v223, 2147483648
        %v352 = vxor.u32 %v224, 2147483648
        %v353 = vxor.u32 %v225, 2147483648
        %v354 = vxor.u32 %v226, 2147483648
        %v355 = vxor.u32 %v227, 2147483648
        %v356 = vxor.u32 %v228, 2147483648
        %v357 = vxor.u32 %v229, 2147483648
        %v358 = vxor.u32 %v230, 2147483648
        %v359 = vxor.u32 %v231, 2147483648
        %v360 = vxor.u32 %v232, 2147483648
        %v361 = vxor.u32 %v233, 2147483648
        %v362 = vxor.u32 %v234, 2147483648
        %v363 = vxor.u32 %v235, 2147483648
        %v364 = vxor.u32 %v236, 2147483648
        %v365 = vxor.u32 %v237, 2147483648
        %v366 = vxor.u32 %v238, 2147483648
        %v367 = vxor.u32 %v239, 2147483648
        %v368 = vxor.u32 %v240, 2147483648
        %v369 = vxor.u32 %v241, 2147483648
        %v370 = vxor.u32 %v242, 2147483648
        %v371 = vxor.u32 %v243, 2147483648
        %v372 = vxor.u32 %v244, 2147483648
        %v373 = vxor.u32 %v245, 2147483648
        %v374 = vxor.u32 %v246, 2147483648
        %v375 = vxor.u32 %v247, 2147483648
        %v376 = vxor.u32 %v248, 2147483648
        %v377 = vxor.u32 %v249, 2147483648
        %v378 = vxor.u32 %v250, 2147483648
        %v379 = vxor.u32 %v251, 2147483648
        %v380 = vxor.u32 %v252, 2147483648
        %v381 = vxor.u32 %v253, 2147483648
        %v382 = vxor.u32 %v254, 2147483648
        %v383 = vxor.u32 %v255, 2147483648
        %v384 = vxor.u32 %v256, 2147483648
        %v385 = vxor.u32 %v257, 2147483648
        %v386 = vxor.u32 %v258, 2147483648
        %v387 = vxor.u32 %v259, 2147483648
        %v388 = vxor.u32 %v260, 2147483648
        %v389 = vxor.u32 %v261, 2147483648
        %v390 = vxor.u32 %v262, 2147483648
        %v391 = vxor.u32 %v263, 2147483648
        %v392 = vxor.u32 %v264, 2147483648
        %v393 = vxor.u32 %v265, 2147483648
        %v394 = vmul.f32 %v266, 1.442695
        %v395 = vpow.pop %v394
        %v396 = vmul.f32 %v267, 1.442695
        %v397 = vpow.pop %v396
        %v398 = vmul.f32 %v268, 1.442695
        %v399 = vpow.pop %v398
        %v400 = vmul.f32 %v269, 1.442695
        %v401 = vpow.pop %v400
        %v402 = vmul.f32 %v270, 1.442695
        %v403 = vpow.pop %v402
        %v404 = vmul.f32 %v271, 1.442695
        %v405 = vpow.pop %v404
        %v406 = vmul.f32 %v272, 1.442695
        %v407 = vpow.pop %v406
        %v408 = vmul.f32 %v273, 1.442695
        %v409 = vpow.pop %v408
        %v410 = vmul.f32 %v274, 1.442695
        %v411 = vpow.pop %v410
        %v412 = vmul.f32 %v275, 1.442695
        %v413 = vpow.pop %v412
        %v414 = vmul.f32 %v276, 1.442695
        %v415 = vpow.pop %v414
        %v416 = vmul.f32 %v277, 1.442695
        %v417 = vpow.pop %v416
        %v418 = vmul.f32 %v278, 1.442695
        %v419 = vpow.pop %v418
        %v420 = vmul.f32 %v279, 1.442695
        %v421 = vpow.pop %v420
        %v422 = vmul.f32 %v280, 1.442695
        %v423 = vpow.pop %v422
        %v424 = vmul.f32 %v281, 1.442695
        %v425 = vpow.pop %v424
        %v426 = vmul.f32 %v282, 1.442695
        %v427 = vpow.pop %v426
        %v428 = vmul.f32 %v283, 1.442695
        %v429 = vpow.pop %v428
        %v430 = vmul.f32 %v284, 1.442695
        %v431 = vpow.pop %v430
        %v432 = vmul.f32 %v285, 1.442695
        %v433 = vpow.pop %v432
        %v434 = vmul.f32 %v286, 1.442695
        %v435 = vpow.pop %v434
        %v436 = vmul.f32 %v287, 1.442695
        %v437 = vpow.pop %v436
        %v438 = vmul.f32 %v288, 1.442695
        %v439 = vpow.pop %v438
        %v440 = vmul.f32 %v289, 1.442695
        %v441 = vpow.pop %v440
        %v442 = vmul.f32 %v290, 1.442695
        %v443 = vpow.pop %v442
        %v444 = vmul.f32 %v291, 1.442695
        %v445 = vpow.pop %v444
        %v446 = vmul.f32 %v292, 1.442695
        %v447 = vpow.pop %v446
        %v448 = vmul.f32 %v293, 1.442695
        %v449 = vpow.pop %v448
        %v450 = vmul.f32 %v294, 1.442695
        %v451 = vpow.pop %v450
        %v452 = vmul.f32 %v295, 1.442695
        %v453 = vpow.pop %v452
        %v454 = vmul.f32 %v296, 1.442695
        %v455 = vpow.pop %v454
        %v456 = vmul.f32 %v297, 1.442695
        %v457 = vpow.pop %v456
        %v458 = vmul.f32 %v298, 1.442695
        %v459 = vpow.pop %v458
        %v460 = vmul.f32 %v299, 1.442695
        %v461 = vpow.pop %v460
        %v462 = vmul.f32 %v300, 1.442695
        %v463 = vpow.pop %v462
        %v464 = vmul.f32 %v301, 1.442695
        %v465 = vpow.pop %v464
        %v466 = vmul.f32 %v302, 1.442695
        %v467 = vpow.pop %v466
        %v468 = vmul.f32 %v303, 1.442695
        %v469 = vpow.pop %v468
        %v470 = vmul.f32 %v304, 1.442695
        %v471 = vpow.pop %v470
        %v472 = vmul.f32 %v305, 1.442695
        %v473 = vpow.pop %v472
        %v474 = vmul.f32 %v306, 1.442695
        %v475 = vpow.pop %v474
        %v476 = vmul.f32 %v307, 1.442695
        %v477 = vpow.pop %v476
        %v478 = vmul.f32 %v308, 1.442695
        %v479 = vpow.pop %v478
        %v480 = vmul.f32 %v309, 1.442695
        %v481 = vpow.pop %v480
        %v482 = vmul.f32 %v310, 1.442695
        %v483 = vpow.pop %v482
        %v484 = vmul.f32 %v311, 1.442695
        %v485 = vpow.pop %v484
        %v486 = vmul.f32 %v312, 1.442695
        %v487 = vpow.pop %v486
        %v488 = vmul.f32 %v313, 1.442695
        %v489 = vpow.pop %v488
        %v490 = vmul.f32 %v314, 1.442695
        %v491 = vpow.pop %v490
        %v492 = vmul.f32 %v315, 1.442695
        %v493 = vpow.pop %v492
        %v494 = vmul.f32 %v316, 1.442695
        %v495 = vpow.pop %v494
        %v496 = vmul.f32 %v317, 1.442695
        %v497 = vpow.pop %v496
        %v498 = vmul.f32 %v318, 1.442695
        %v499 = vpow.pop %v498
        %v500 = vmul.f32 %v319, 1.442695
        %v501 = vpow.pop %v500
        %v502 = vmul.f32 %v320, 1.442695
        %v503 = vpow.pop %v502
        %v504 = vmul.f32 %v321, 1.442695
        %v505 = vpow.pop %v504
        %v506 = vmul.f32 %v322, 1.442695
        %v507 = vpow.pop %v506
        %v508 = vmul.f32 %v323, 1.442695
        %v509 = vpow.pop %v508
        %v510 = vmul.f32 %v324, 1.442695
        %v511 = vpow.pop %v510
        %v512 = vmul.f32 %v325, 1.442695
        %v513 = vpow.pop %v512
        %v514 = vmul.f32 %v326, 1.442695
        %v515 = vpow.pop %v514
        %v516 = vmul.f32 %v327, 1.442695
        %v517 = vpow.pop %v516
        %v518 = vmul.f32 %v328, 1.442695
        %v519 = vpow.pop %v518
        %v520 = vmul.f32 %v329, 1.442695
        %v521 = vpow.pop %v520
        %v522 = vmul.f32 %v330, 1.442695
        %v523 = vpow.pop %v522
        %v524 = vmul.f32 %v331, 1.442695
        %v525 = vpow.pop %v524
        %v526 = vmul.f32 %v332, 1.442695
        %v527 = vpow.pop %v526
        %v528 = vmul.f32 %v333, 1.442695
        %v529 = vpow.pop %v528
        %v530 = vmul.f32 %v334, 1.442695
        %v531 = vpow.pop %v530
        %v532 = vmul.f32 %v335, 1.442695
        %v533 = vpow.pop %v532
        %v534 = vmul.f32 %v336, 1.442695
        %v535 = vpow.pop %v534
        %v536 = vmul.f32 %v337, 1.442695
        %v537 = vpow.pop %v536
        %v538 = vmul.f32 %v338, 1.442695
        %v539 = vpow.pop %v538
        %v540 = vmul.f32 %v339, 1.442695
        %v541 = vpow.pop %v540
        %v542 = vmul.f32 %v340, 1.442695
        %v543 = vpow.pop %v542
        %v544 = vmul.f32 %v341, 1.442695
        %v545 = vpow.pop %v544
        %v546 = vmul.f32 %v342, 1.442695
        %v547 = vpow.pop %v546
        %v548 = vmul.f32 %v343, 1.442695
        %v549 = vpow.pop %v548
        %v550 = vmul.f32 %v344, 1.442695
        %v551 = vpow.pop %v550
        %v552 = vmul.f32 %v345, 1.442695
        %v553 = vpow.pop %v552
        %v554 = vmul.f32 %v346, 1.442695
        %v555 = vpow.pop %v554
        %v556 = vmul.f32 %v347, 1.442695
        %v557 = vpow.pop %v556
        %v558 = vmul.f32 %v348, 1.442695
        %v559 = vpow.pop %v558
        %v560 = vmul.f32 %v349, 1.442695
        %v561 = vpow.pop %v560
        %v562 = vmul.f32 %v350, 1.442695
        %v563 = vpow.pop %v562
        %v564 = vmul.f32 %v351, 1.442695
        %v565 = vpow.pop %v564
        %v566 = vmul.f32 %v352, 1.442695
        %v567 = vpow.pop %v566
        %v568 = vmul.f32 %v353, 1.442695
        %v569 = vpow.pop %v568
        %v570 = vmul.f32 %v354, 1.442695
        %v571 = vpow.pop %v570
        %v572 = vmul.f32 %v355, 1.442695
        %v573 = vpow.pop %v572
        %v574 = vmul.f32 %v356, 1.442695
        %v575 = vpow.pop %v574
        %v576 = vmul.f32 %v357, 1.442695
        %v577 = vpow.pop %v576
        %v578 = vmul.f32 %v358, 1.442695
        %v579 = vpow.pop %v578
        %v580 = vmul.f32 %v359, 1.442695
        %v581 = vpow.pop %v580
        %v582 = vmul.f32 %v360, 1.442695
        %v583 = vpow.pop %v582
        %v584 = vmul.f32 %v361, 1.442695
        %v585 = vpow.pop %v584
        %v586 = vmul.f32 %v362, 1.442695
        %v587 = vpow.pop %v586
        %v588 = vmul.f32 %v363, 1.442695
        %v589 = vpow.pop %v588
        %v590 = vmul.f32 %v364, 1.442695
        %v591 = vpow.pop %v590
        %v592 = vmul.f32 %v365, 1.442695
        %v593 = vpow.pop %v592
        %v594 = vmul.f32 %v366, 1.442695
        %v595 = vpow.pop %v594
        %v596 = vmul.f32 %v367, 1.442695
        %v597 = vpow.pop %v596
        %v598 = vmul.f32 %v368, 1.442695
        %v599 = vpow.pop %v598
        %v600 = vmul.f32 %v369, 1.442695
        %v601 = vpow.pop %v600
        %v602 = vmul.f32 %v370, 1.442695
        %v603 = vpow.pop %v602
        %v604 = vmul.f32 %v371, 1.442695
        %v605 = vpow.pop %v604
        %v606 = vmul.f32 %v372, 1.442695
        %v607 = vpow.pop %v606
        %v608 = vmul.f32 %v373, 1.442695
        %v609 = vpow.pop %v608
        %v610 = vmul.f32 %v374, 1.442695
        %v611 = vpow.pop %v610
        %v612 = vmul.f32 %v375, 1.442695
        %v613 = vpow.pop %v612
        %v614 = vmul.f32 %v376, 1.442695
        %v615 = vpow.pop %v614
        %v616 = vmul.f32 %v377, 1.442695
        %v617 = vpow.pop %v616
        %v618 = vmul.f32 %v378, 1.442695
        %v619 = vpow.pop %v618
        %v620 = vmul.f32 %v379, 1.442695
        %v621 = vpow.pop %v620
        %v622 = vmul.f32 %v380, 1.442695
        %v623 = vpow.pop %v622
        %v624 = vmul.f32 %v381, 1.442695
        %v625 = vpow.pop %v624
        %v626 = vmul.f32 %v382, 1.442695
        %v627 = vpow.pop %v626
        %v628 = vmul.f32 %v383, 1.442695
        %v629 = vpow.pop %v628
        %v630 = vmul.f32 %v384, 1.442695
        %v631 = vpow.pop %v630
        %v632 = vmul.f32 %v385, 1.442695
        %v633 = vpow.pop %v632
        %v634 = vmul.f32 %v386, 1.442695
        %v635 = vpow.pop %v634
        %v636 = vmul.f32 %v387, 1.442695
        %v637 = vpow.pop %v636
        %v638 = vmul.f32 %v388, 1.442695
        %v639 = vpow.pop %v638
        %v640 = vmul.f32 %v389, 1.442695
        %v641 = vpow.pop %v640
        %v642 = vmul.f32 %v390, 1.442695
        %v643 = vpow.pop %v642
        %v644 = vmul.f32 %v391, 1.442695
        %v645 = vpow.pop %v644
        %v646 = vmul.f32 %v392, 1.442695
        %v647 = vpow.pop %v646
        %v648 = vmul.f32 %v393, 1.442695
        %v649 = vpow.pop %v648
        %v650 = vadd.f32 %v395, 1.0
        %v651 = vadd.f32 %v397, 1.0
        %v652 = vadd.f32 %v399, 1.0
        %v653 = vadd.f32 %v401, 1.0
        %v654 = vadd.f32 %v403, 1.0
        %v655 = vadd.f32 %v405, 1.0
        %v656 = vadd.f32 %v407, 1.0
        %v657 = vadd.f32 %v409, 1.0
        %v658 = vadd.f32 %v411, 1.0
        %v659 = vadd.f32 %v413, 1.0
        %v660 = vadd.f32 %v415, 1.0
        %v661 = vadd.f32 %v417, 1.0
        %v662 = vadd.f32 %v419, 1.0
        %v663 = vadd.f32 %v421, 1.0
        %v664 = vadd.f32 %v423, 1.0
        %v665 = vadd.f32 %v425, 1.0
        %v666 = vadd.f32 %v427, 1.0
        %v667 = vadd.f32 %v429, 1.0
        %v668 = vadd.f32 %v431, 1.0
        %v669 = vadd.f32 %v433, 1.0
        %v670 = vadd.f32 %v435, 1.0
        %v671 = vadd.f32 %v437, 1.0
        %v672 = vadd.f32 %v439, 1.0
        %v673 = vadd.f32 %v441, 1.0
        %v674 = vadd.f32 %v443, 1.0
        %v675 = vadd.f32 %v445, 1.0
        %v676 = vadd.f32 %v447, 1.0
        %v677 = vadd.f32 %v449, 1.0
        %v678 = vadd.f32 %v451, 1.0
        %v679 = vadd.f32 %v453, 1.0
        %v680 = vadd.f32 %v455, 1.0
        %v681 = vadd.f32 %v457, 1.0
        %v682 = vadd.f32 %v459, 1.0
        %v683 = vadd.f32 %v461, 1.0
        %v684 = vadd.f32 %v463, 1.0
        %v685 = vadd.f32 %v465, 1.0
        %v686 = vadd.f32 %v467, 1.0
        %v687 = vadd.f32 %v469, 1.0
        %v688 = vadd.f32 %v471, 1.0
        %v689 = vadd.f32 %v473, 1.0
        %v690 = vadd.f32 %v475, 1.0
        %v691 = vadd.f32 %v477, 1.0
        %v692 = vadd.f32 %v479, 1.0
        %v693 = vadd.f32 %v481, 1.0
        %v694 = vadd.f32 %v483, 1.0
        %v695 = vadd.f32 %v485, 1.0
        %v696 = vadd.f32 %v487, 1.0
        %v697 = vadd.f32 %v489, 1.0
        %v698 = vadd.f32 %v491, 1.0
        %v699 = vadd.f32 %v493, 1.0
        %v700 = vadd.f32 %v495, 1.0
        %v701 = vadd.f32 %v497, 1.0
        %v702 = vadd.f32 %v499, 1.0
        %v703 = vadd.f32 %v501, 1.0
        %v704 = vadd.f32 %v503, 1.0
        %v705 = vadd.f32 %v505, 1.0
        %v706 = vadd.f32 %v507, 1.0
        %v707 = vadd.f32 %v509, 1.0
        %v708 = vadd.f32 %v511, 1.0
        %v709 = vadd.f32 %v513, 1.0
        %v710 = vadd.f32 %v515, 1.0
        %v711 = vadd.f32 %v517, 1.0
        %v712 = vadd.f32 %v519, 1.0
        %v713 = vadd.f32 %v521, 1.0
        %v714 = vadd.f32 %v523, 1.0
        %v715 = vadd.f32 %v525, 1.0
        %v716 = vadd.f32 %v527, 1.0
        %v717 = vadd.f32 %v529, 1.0
        %v718 = vadd.f32 %v531, 1.0
        %v719 = vadd.f32 %v533, 1.0
        %v720 = vadd.f32 %v535, 1.0
        %v721 = vadd.f32 %v537, 1.0
        %v722 = vadd.f32 %v539, 1.0
        %v723 = vadd.f32 %v541, 1.0
        %v724 = vadd.f32 %v543, 1.0
        %v725 = vadd.f32 %v545, 1.0
        %v726 = vadd.f32 %v547, 1.0
        %v727 = vadd.f32 %v549, 1.0
        %v728 = vadd.f32 %v551, 1.0
        %v729 = vadd.f32 %v553, 1.0
        %v730 = vadd.f32 %v555, 1.0
        %v731 = vadd.f32 %v557, 1.0
        %v732 = vadd.f32 %v559, 1.0
        %v733 = vadd.f32 %v561, 1.0
        %v734 = vadd.f32 %v563, 1.0
        %v735 = vadd.f32 %v565, 1.0
        %v736 = vadd.f32 %v567, 1.0
        %v737 = vadd.f32 %v569, 1.0
        %v738 = vadd.f32 %v571, 1.0
        %v739 = vadd.f32 %v573, 1.0
        %v740 = vadd.f32 %v575, 1.0
        %v741 = vadd.f32 %v577, 1.0
        %v742 = vadd.f32 %v579, 1.0
        %v743 = vadd.f32 %v581, 1.0
        %v744 = vadd.f32 %v583, 1.0
        %v745 = vadd.f32 %v585, 1.0
        %v746 = vadd.f32 %v587, 1.0
        %v747 = vadd.f32 %v589, 1.0
        %v748 = vadd.f32 %v591, 1.0
        %v749 = vadd.f32 %v593, 1.0
        %v750 = vadd.f32 %v595, 1.0
        %v751 = vadd.f32 %v597, 1.0
        %v752 = vadd.f32 %v599, 1.0
        %v753 = vadd.f32 %v601, 1.0
        %v754 = vadd.f32 %v603, 1.0
        %v755 = vadd.f32 %v605, 1.0
        %v756 = vadd.f32 %v607, 1.0
        %v757 = vadd.f32 %v609, 1.0
        %v758 = vadd.f32 %v611, 1.0
        %v759 = vadd.f32 %v613, 1.0
        %v760 = vadd.f32 %v615, 1.0
        %v761 = vadd.f32 %v617, 1.0
        %v762 = vadd.f32 %v619, 1.0
        %v763 = vadd.f32 %v621, 1.0
        %v764 = vadd.f32 %v623, 1.0
        %v765 = vadd.f32 %v625, 1.0
        %v766 = vadd.f32 %v627, 1.0
        %v767 = vadd.f32 %v629, 1.0
        %v768 = vadd.f32 %v631, 1.0
        %v769 = vadd.f32 %v633, 1.0
        %v770 = vadd.f32 %v635, 1.0
        %v771 = vadd.f32 %v637, 1.0
        %v772 = vadd.f32 %v639, 1.0
        %v773 = vadd.f32 %v641, 1.0
        %v774 = vadd.f32 %v643, 1.0
        %v775 = vadd.f32 %v645, 1.0
        %v776 = vadd.f32 %v647, 1.0
        %v777 = vadd.f32 %v649, 1.0
        %v778 = vrcp.pop %v650
        %v779 = vmul.f32 1.0, %v778
        %v780 = vrcp.pop %v651
        %v781 = vmul.f32 1.0, %v780
        %v782 = vrcp.pop %v652
        %v783 = vmul.f32 1.0, %v782
        %v784 = vrcp.pop %v653
        %v785 = vmul.f32 1.0, %v784
        %v786 = vrcp.pop %v654
        %v787 = vmul.f32 1.0, %v786
        %v788 = vrcp.pop %v655
        %v789 = vmul.f32 1.0, %v788
        %v790 = vrcp.pop %v656
        %v791 = vmul.f32 1.0, %v790
        %v792 = vrcp.pop %v657
        %v793 = vmul.f32 1.0, %v792
        %v794 = vrcp.pop %v658
        %v795 = vmul.f32 1.0, %v794
        %v796 = vrcp.pop %v659
        %v797 = vmul.f32 1.0, %v796
        %v798 = vrcp.pop %v660
        %v799 = vmul.f32 1.0, %v798
        %v800 = vrcp.pop %v661
        %v801 = vmul.f32 1.0, %v800
        %v802 = vrcp.pop %v662
        %v803 = vmul.f32 1.0, %v802
        %v804 = vrcp.pop %v663
        %v805 = vmul.f32 1.0, %v804
        %v806 = vrcp.pop %v664
        %v807 = vmul.f32 1.0, %v806
        %v808 = vrcp.pop %v665
        %v809 = vmul.f32 1.0, %v808
        %v810 = vrcp.pop %v666
        %v811 = vmul.f32 1.0, %v810
        %v812 = vrcp.pop %v667
        %v813 = vmul.f32 1.0, %v812
        %v814 = vrcp.pop %v668
        %v815 = vmul.f32 1.0, %v814
        %v816 = vrcp.pop %v669
        %v817 = vmul.f32 1.0, %v816
        %v818 = vrcp.pop %v670
        %v819 = vmul.f32 1.0, %v818
        %v820 = vrcp.pop %v671
        %v821 = vmul.f32 1.0, %v820
        %v822 = vrcp.pop %v672
        %v823 = vmul.f32 1.0, %v822
        %v824 = vrcp.pop %v673
        %v825 = vmul.f32 1.0, %v824
        %v826 = vrcp.pop %v674
        %v827 = vmul.f32 1.0, %v826
        %v828 = vrcp.pop %v675
        %v829 = vmul.f32 1.0, %v828
        %v830 = vrcp.pop %v676
        %v831 = vmul.f32 1.0, %v830
        %v832 = vrcp.pop %v677
        %v833 = vmul.f32 1.0, %v832
        %v834 = vrcp.pop %v678
        %v835 = vmul.f32 1.0, %v834
        %v836 = vrcp.pop %v679
        %v837 = vmul.f32 1.0, %v836
        %v838 = vrcp.pop %v680
        %v839 = vmul.f32 1.0, %v838
        %v840 = vrcp.pop %v681
        %v841 = vmul.f32 1.0, %v840
        %v842 = vrcp.pop %v682
        %v843 = vmul.f32 1.0, %v842
        %v844 = vrcp.pop %v683
        %v845 = vmul.f32 1.0, %v844
        %v846 = vrcp.pop %v684
        %v847 = vmul.f32 1.0, %v846
        %v848 = vrcp.pop %v685
        %v849 = vmul.f32 1.0, %v848
        %v850 = vrcp.pop %v686
        %v851 = vmul.f32 1.0, %v850
        %v852 = vrcp.pop %v687
        %v853 = vmul.f32 1.0, %v852
        %v854 = vrcp.pop %v688
        %v855 = vmul.f32 1.0, %v854
        %v856 = vrcp.pop %v689
        %v857 = vmul.f32 1.0, %v856
        %v858 = vrcp.pop %v690
        %v859 = vmul.f32 1.0, %v858
        %v860 = vrcp.pop %v691
        %v861 = vmul.f32 1.0, %v860
        %v862 = vrcp.pop %v692
        %v863 = vmul.f32 1.0, %v862
        %v864 = vrcp.pop %v693
        %v865 = vmul.f32 1.0, %v864
        %v866 = vrcp.pop %v694
        %v867 = vmul.f32 1.0, %v866
        %v868 = vrcp.pop %v695
        %v869 = vmul.f32 1.0, %v868
        %v870 = vrcp.pop %v696
        %v871 = vmul.f32 1.0, %v870
        %v872 = vrcp.pop %v697
        %v873 = vmul.f32 1.0, %v872
        %v874 = vrcp.pop %v698
        %v875 = vmul.f32 1.0, %v874
        %v876 = vrcp.pop %v699
        %v877 = vmul.f32 1.0, %v876
        %v878 = vrcp.pop %v700
        %v879 = vmul.f32 1.0, %v878
        %v880 = vrcp.pop %v701
        %v881 = vmul.f32 1.0, %v880
        %v882 = vrcp.pop %v702
        %v883 = vmul.f32 1.0, %v882
        %v884 = vrcp.pop %v703
        %v885 = vmul.f32 1.0, %v884
        %v886 = vrcp.pop %v704
        %v887 = vmul.f32 1.0, %v886
        %v888 = vrcp.pop %v705
        %v889 = vmul.f32 1.0, %v888
        %v890 = vrcp.pop %v706
        %v891 = vmul.f32 1.0, %v890
        %v892 = vrcp.pop %v707
        %v893 = vmul.f32 1.0, %v892
        %v894 = vrcp.pop %v708
        %v895 = vmul.f32 1.0, %v894
        %v896 = vrcp.pop %v709
        %v897 = vmul.f32 1.0, %v896
        %v898 = vrcp.pop %v710
        %v899 = vmul.f32 1.0, %v898
        %v900 = vrcp.pop %v711
        %v901 = vmul.f32 1.0, %v900
        %v902 = vrcp.pop %v712
        %v903 = vmul.f32 1.0, %v902
        %v904 = vrcp.pop %v713
        %v905 = vmul.f32 1.0, %v904
        %v906 = vrcp.pop %v714
        %v907 = vmul.f32 1.0, %v906
        %v908 = vrcp.pop %v715
        %v909 = vmul.f32 1.0, %v908
        %v910 = vrcp.pop %v716
        %v911 = vmul.f32 1.0, %v910
        %v912 = vrcp.pop %v717
        %v913 = vmul.f32 1.0, %v912
        %v914 = vrcp.pop %v718
        %v915 = vmul.f32 1.0, %v914
        %v916 = vrcp.pop %v719
        %v917 = vmul.f32 1.0, %v916
        %v918 = vrcp.pop %v720
        %v919 = vmul.f32 1.0, %v918
        %v920 = vrcp.pop %v721
        %v921 = vmul.f32 1.0, %v920
        %v922 = vrcp.pop %v722
        %v923 = vmul.f32 1.0, %v922
        %v924 = vrcp.pop %v723
        %v925 = vmul.f32 1.0, %v924
        %v926 = vrcp.pop %v724
        %v927 = vmul.f32 1.0, %v926
        %v928 = vrcp.pop %v725
        %v929 = vmul.f32 1.0, %v928
        %v930 = vrcp.pop %v726
        %v931 = vmul.f32 1.0, %v930
        %v932 = vrcp.pop %v727
        %v933 = vmul.f32 1.0, %v932
        %v934 = vrcp.pop %v728
        %v935 = vmul.f32 1.0, %v934
        %v936 = vrcp.pop %v729
        %v937 = vmul.f32 1.0, %v936
        %v938 = vrcp.pop %v730
        %v939 = vmul.f32 1.0, %v938
        %v940 = vrcp.pop %v731
        %v941 = vmul.f32 1.0, %v940
        %v942 = vrcp.pop %v732
        %v943 = vmul.f32 1.0, %v942
        %v944 = vrcp.pop %v733
        %v945 = vmul.f32 1.0, %v944
        %v946 = vrcp.pop %v734
        %v947 = vmul.f32 1.0, %v946
        %v948 = vrcp.pop %v735
        %v949 = vmul.f32 1.0, %v948
        %v950 = vrcp.pop %v736
        %v951 = vmul.f32 1.0, %v950
        %v952 = vrcp.pop %v737
        %v953 = vmul.f32 1.0, %v952
        %v954 = vrcp.pop %v738
        %v955 = vmul.f32 1.0, %v954
        %v956 = vrcp.pop %v739
        %v957 = vmul.f32 1.0, %v956
        %v958 = vrcp.pop %v740
        %v959 = vmul.f32 1.0, %v958
        %v960 = vrcp.pop %v741
        %v961 = vmul.f32 1.0, %v960
        %v962 = vrcp.pop %v742
        %v963 = vmul.f32 1.0, %v962
        %v964 = vrcp.pop %v743
        %v965 = vmul.f32 1.0, %v964
        %v966 = vrcp.pop %v744
        %v967 = vmul.f32 1.0, %v966
        %v968 = vrcp.pop %v745
        %v969 = vmul.f32 1.0, %v968
        %v970 = vrcp.pop %v746
        %v971 = vmul.f32 1.0, %v970
        %v972 = vrcp.pop %v747
        %v973 = vmul.f32 1.0, %v972
        %v974 = vrcp.pop %v748
        %v975 = vmul.f32 1.0, %v974
        %v976 = vrcp.pop %v749
        %v977 = vmul.f32 1.0, %v976
        %v978 = vrcp.pop %v750
        %v979 = vmul.f32 1.0, %v978
        %v980 = vrcp.pop %v751
        %v981 = vmul.f32 1.0, %v980
        %v982 = vrcp.pop %v752
        %v983 = vmul.f32 1.0, %v982
        %v984 = vrcp.pop %v753
        %v985 = vmul.f32 1.0, %v984
        %v986 = vrcp.pop %v754
        %v987 = vmul.f32 1.0, %v986
        %v988 = vrcp.pop %v755
        %v989 = vmul.f32 1.0, %v988
        %v990 = vrcp.pop %v756
        %v991 = vmul.f32 1.0, %v990
        %v992 = vrcp.pop %v757
        %v993 = vmul.f32 1.0, %v992
        %v994 = vrcp.pop %v758
        %v995 = vmul.f32 1.0, %v994
        %v996 = vrcp.pop %v759
        %v997 = vmul.f32 1.0, %v996
        %v998 = vrcp.pop %v760
        %v999 = vmul.f32 1.0, %v998
        %v1000 = vrcp.pop %v761
        %v1001 = vmul.f32 1.0, %v1000
        %v1002 = vrcp.pop %v762
        %v1003 = vmul.f32 1.0, %v1002
        %v1004 = vrcp.pop %v763
        %v1005 = vmul.f32 1.0, %v1004
        %v1006 = vrcp.pop %v764
        %v1007 = vmul.f32 1.0, %v1006
        %v1008 = vrcp.pop %v765
        %v1009 = vmul.f32 1.0, %v1008
        %v1010 = vrcp.pop %v766
        %v1011 = vmul.f32 1.0, %v1010
        %v1012 = vrcp.pop %v767
        %v1013 = vmul.f32 1.0, %v1012
        %v1014 = vrcp.pop %v768
        %v1015 = vmul.f32 1.0, %v1014
        %v1016 = vrcp.pop %v769
        %v1017 = vmul.f32 1.0, %v1016
        %v1018 = vrcp.pop %v770
        %v1019 = vmul.f32 1.0, %v1018
        %v1020 = vrcp.pop %v771
        %v1021 = vmul.f32 1.0, %v1020
        %v1022 = vrcp.pop %v772
        %v1023 = vmul.f32 1.0, %v1022
        %v1024 = vrcp.pop %v773
        %v1025 = vmul.f32 1.0, %v1024
        %v1026 = vrcp.pop %v774
        %v1027 = vmul.f32 1.0, %v1026
        %v1028 = vrcp.pop %v775
        %v1029 = vmul.f32 1.0, %v1028
        %v1030 = vrcp.pop %v776
        %v1031 = vmul.f32 1.0, %v1030
        %v1032 = vrcp.pop %v777
        %v1033 = vmul.f32 1.0, %v1032
        %v1034 = vmul.f32 %v138, %v779
        %v1035 = vmul.f32 %v139, %v781
        %v1036 = vmul.f32 %v140, %v783
        %v1037 = vmul.f32 %v141, %v785
        %v1038 = vmul.f32 %v142, %v787
        %v1039 = vmul.f32 %v143, %v789
        %v1040 = vmul.f32 %v144, %v791
        %v1041 = vmul.f32 %v145, %v793
        %v1042 = vmul.f32 %v146, %v795
        %v1043 = vmul.f32 %v147, %v797
        %v1044 = vmul.f32 %v148, %v799
        %v1045 = vmul.f32 %v149, %v801
        %v1046 = vmul.f32 %v150, %v803
        %v1047 = vmul.f32 %v151, %v805
        %v1048 = vmul.f32 %v152, %v807
        %v1049 = vmul.f32 %v153, %v809
        %v1050 = vmul.f32 %v154, %v811
        %v1051 = vmul.f32 %v155, %v813
        %v1052 = vmul.f32 %v156, %v815
        %v1053 = vmul.f32 %v157, %v817
        %v1054 = vmul.f32 %v158, %v819
        %v1055 = vmul.f32 %v159, %v821
        %v1056 = vmul.f32 %v160, %v823
        %v1057 = vmul.f32 %v161, %v825
        %v1058 = vmul.f32 %v162, %v827
        %v1059 = vmul.f32 %v163, %v829
        %v1060 = vmul.f32 %v164, %v831
        %v1061 = vmul.f32 %v165, %v833
        %v1062 = vmul.f32 %v166, %v835
        %v1063 = vmul.f32 %v167, %v837
        %v1064 = vmul.f32 %v168, %v839
        %v1065 = vmul.f32 %v169, %v841
        %v1066 = vmul.f32 %v170, %v843
        %v1067 = vmul.f32 %v171, %v845
        %v1068 = vmul.f32 %v172, %v847
        %v1069 = vmul.f32 %v173, %v849
        %v1070 = vmul.f32 %v174, %v851
        %v1071 = vmul.f32 %v175, %v853
        %v1072 = vmul.f32 %v176, %v855
        %v1073 = vmul.f32 %v177, %v857
        %v1074 = vmul.f32 %v178, %v859
        %v1075 = vmul.f32 %v179, %v861
        %v1076 = vmul.f32 %v180, %v863
        %v1077 = vmul.f32 %v181, %v865
        %v1078 = vmul.f32 %v182, %v867
        %v1079 = vmul.f32 %v183, %v869
        %v1080 = vmul.f32 %v184, %v871
        %v1081 = vmul.f32 %v185, %v873
        %v1082 = vmul.f32 %v186, %v875
        %v1083 = vmul.f32 %v187, %v877
        %v1084 = vmul.f32 %v188, %v879
        %v1085 = vmul.f32 %v189, %v881
        %v1086 = vmul.f32 %v190, %v883
        %v1087 = vmul.f32 %v191, %v885
        %v1088 = vmul.f32 %v192, %v887
        %v1089 = vmul.f32 %v193, %v889
        %v1090 = vmul.f32 %v194, %v891
        %v1091 = vmul.f32 %v195, %v893
        %v1092 = vmul.f32 %v196, %v895
        %v1093 = vmul.f32 %v197, %v897
        %v1094 = vmul.f32 %v198, %v899
        %v1095 = vmul.f32 %v199, %v901
        %v1096 = vmul.f32 %v200, %v903
        %v1097 = vmul.f32 %v201, %v905
        %v1098 = vmul.f32 %v202, %v907
        %v1099 = vmul.f32 %v203, %v909
        %v1100 = vmul.f32 %v204, %v911
        %v1101 = vmul.f32 %v205, %v913
        %v1102 = vmul.f32 %v206, %v915
        %v1103 = vmul.f32 %v207, %v917
        %v1104 = vmul.f32 %v208, %v919
        %v1105 = vmul.f32 %v209, %v921
        %v1106 = vmul.f32 %v210, %v923
        %v1107 = vmul.f32 %v211, %v925
        %v1108 = vmul.f32 %v212, %v927
        %v1109 = vmul.f32 %v213, %v929
        %v1110 = vmul.f32 %v214, %v931
        %v1111 = vmul.f32 %v215, %v933
        %v1112 = vmul.f32 %v216, %v935
        %v1113 = vmul.f32 %v217, %v937
        %v1114 = vmul.f32 %v218, %v939
        %v1115 = vmul.f32 %v219, %v941
        %v1116 = vmul.f32 %v220, %v943
        %v1117 = vmul.f32 %v221, %v945
        %v1118 = vmul.f32 %v222, %v947
        %v1119 = vmul.f32 %v223, %v949
        %v1120 = vmul.f32 %v224, %v951
        %v1121 = vmul.f32 %v225, %v953
        %v1122 = vmul.f32 %v226, %v955
        %v1123 = vmul.f32 %v227, %v957
        %v1124 = vmul.f32 %v228, %v959
        %v1125 = vmul.f32 %v229, %v961
        %v1126 = vmul.f32 %v230, %v963
        %v1127 = vmul.f32 %v231, %v965
        %v1128 = vmul.f32 %v232, %v967
        %v1129 = vmul.f32 %v233, %v969
        %v1130 = vmul.f32 %v234, %v971
        %v1131 = vmul.f32 %v235, %v973
        %v1132 = vmul.f32 %v236, %v975
        %v1133 = vmul.f32 %v237, %v977
        %v1134 = vmul.f32 %v238, %v979
        %v1135 = vmul.f32 %v239, %v981
        %v1136 = vmul.f32 %v240, %v983
        %v1137 = vmul.f32 %v241, %v985
        %v1138 = vmul.f32 %v242, %v987
        %v1139 = vmul.f32 %v243, %v989
        %v1140 = vmul.f32 %v244, %v991
        %v1141 = vmul.f32 %v245, %v993
        %v1142 = vmul.f32 %v246, %v995
        %v1143 = vmul.f32 %v247, %v997
        %v1144 = vmul.f32 %v248, %v999
        %v1145 = vmul.f32 %v249, %v1001
        %v1146 = vmul.f32 %v250, %v1003
        %v1147 = vmul.f32 %v251, %v1005
        %v1148 = vmul.f32 %v252, %v1007
        %v1149 = vmul.f32 %v253, %v1009
        %v1150 = vmul.f32 %v254, %v1011
        %v1151 = vmul.f32 %v255, %v1013
        %v1152 = vmul.f32 %v256, %v1015
        %v1153 = vmul.f32 %v257, %v1017
        %v1154 = vmul.f32 %v258, %v1019
        %v1155 = vmul.f32 %v259, %v1021
        %v1156 = vmul.f32 %v260, %v1023
        %v1157 = vmul.f32 %v261, %v1025
        %v1158 = vmul.f32 %v262, %v1027
        %v1159 = vmul.f32 %v263, %v1029
        %v1160 = vmul.f32 %v264, %v1031
        %v1161 = vmul.f32 %v265, %v1033
        %1162 = vst [vmem:[%s135] sm:$0xff] %v1034
        %1163 = vst [vmem:[%s135 + $0x8] sm:$0xff] %v1035
        %1164 = vst [vmem:[%s135 + $0x10] sm:$0xff] %v1036
        %1165 = vst [vmem:[%s135 + $0x18] sm:$0xff] %v1037
        %1166 = vst [vmem:[%s135 + $0x20] sm:$0xff] %v1038
        %1167 = vst [vmem:[%s135 + $0x28] sm:$0xff] %v1039
        %1168 = vst [vmem:[%s135 + $0x30] sm:$0xff] %v1040
        %1169 = vst [vmem:[%s135 + $0x38] sm:$0xff] %v1041
        %1170 = vst [vmem:[%s135 + $0x40] sm:$0xff] %v1042
        %1171 = vst [vmem:[%s135 + $0x48] sm:$0xff] %v1043
        %1172 = vst [vmem:[%s135 + $0x50] sm:$0xff] %v1044
        %1173 = vst [vmem:[%s135 + $0x58] sm:$0xff] %v1045
        %1174 = vst [vmem:[%s135 + $0x60] sm:$0xff] %v1046
        %1175 = vst [vmem:[%s135 + $0x68] sm:$0xff] %v1047
        %1176 = vst [vmem:[%s135 + $0x70] sm:$0xff] %v1048
        %1177 = vst [vmem:[%s135 + $0x78] sm:$0xff] %v1049
        %1178 = vst [vmem:[%s135 + $0x80] sm:$0xff] %v1050
        %1179 = vst [vmem:[%s135 + $0x88] sm:$0xff] %v1051
        %1180 = vst [vmem:[%s135 + $0x90] sm:$0xff] %v1052
        %1181 = vst [vmem:[%s135 + $0x98] sm:$0xff] %v1053
        %1182 = vst [vmem:[%s135 + $0xa0] sm:$0xff] %v1054
        %1183 = vst [vmem:[%s135 + $0xa8] sm:$0xff] %v1055
        %1184 = vst [vmem:[%s135 + $0xb0] sm:$0xff] %v1056
        %1185 = vst [vmem:[%s135 + $0xb8] sm:$0xff] %v1057
        %1186 = vst [vmem:[%s135 + $0xc0] sm:$0xff] %v1058
        %1187 = vst [vmem:[%s135 + $0xc8] sm:$0xff] %v1059
        %1188 = vst [vmem:[%s135 + $0xd0] sm:$0xff] %v1060
        %1189 = vst [vmem:[%s135 + $0xd8] sm:$0xff] %v1061
        %1190 = vst [vmem:[%s135 + $0xe0] sm:$0xff] %v1062
        %1191 = vst [vmem:[%s135 + $0xe8] sm:$0xff] %v1063
        %1192 = vst [vmem:[%s135 + $0xf0] sm:$0xff] %v1064
        %1193 = vst [vmem:[%s135 + $0xf8] sm:$0xff] %v1065
        %1194 = vst [vmem:[%s135 + $0x100] sm:$0xff] %v1066
        %1195 = vst [vmem:[%s135 + $0x108] sm:$0xff] %v1067
        %1196 = vst [vmem:[%s135 + $0x110] sm:$0xff] %v1068
        %1197 = vst [vmem:[%s135 + $0x118] sm:$0xff] %v1069
        %1198 = vst [vmem:[%s135 + $0x120] sm:$0xff] %v1070
        %1199 = vst [vmem:[%s135 + $0x128] sm:$0xff] %v1071
        %1200 = vst [vmem:[%s135 + $0x130] sm:$0xff] %v1072
        %1201 = vst [vmem:[%s135 + $0x138] sm:$0xff] %v1073
        %1202 = vst [vmem:[%s135 + $0x140] sm:$0xff] %v1074
        %1203 = vst [vmem:[%s135 + $0x148] sm:$0xff] %v1075
        %1204 = vst [vmem:[%s135 + $0x150] sm:$0xff] %v1076
        %1205 = vst [vmem:[%s135 + $0x158] sm:$0xff] %v1077
        %1206 = vst [vmem:[%s135 + $0x160] sm:$0xff] %v1078
        %1207 = vst [vmem:[%s135 + $0x168] sm:$0xff] %v1079
        %1208 = vst [vmem:[%s135 + $0x170] sm:$0xff] %v1080
        %1209 = vst [vmem:[%s135 + $0x178] sm:$0xff] %v1081
        %1210 = vst [vmem:[%s135 + $0x180] sm:$0xff] %v1082
        %1211 = vst [vmem:[%s135 + $0x188] sm:$0xff] %v1083
        %1212 = vst [vmem:[%s135 + $0x190] sm:$0xff] %v1084
        %1213 = vst [vmem:[%s135 + $0x198] sm:$0xff] %v1085
        %1214 = vst [vmem:[%s135 + $0x1a0] sm:$0xff] %v1086
        %1215 = vst [vmem:[%s135 + $0x1a8] sm:$0xff] %v1087
        %1216 = vst [vmem:[%s135 + $0x1b0] sm:$0xff] %v1088
        %1217 = vst [vmem:[%s135 + $0x1b8] sm:$0xff] %v1089
        %1218 = vst [vmem:[%s135 + $0x1c0] sm:$0xff] %v1090
        %1219 = vst [vmem:[%s135 + $0x1c8] sm:$0xff] %v1091
        %1220 = vst [vmem:[%s135 + $0x1d0] sm:$0xff] %v1092
        %1221 = vst [vmem:[%s135 + $0x1d8] sm:$0xff] %v1093
        %1222 = vst [vmem:[%s135 + $0x1e0] sm:$0xff] %v1094
        %1223 = vst [vmem:[%s135 + $0x1e8] sm:$0xff] %v1095
        %1224 = vst [vmem:[%s135 + $0x1f0] sm:$0xff] %v1096
        %1225 = vst [vmem:[%s135 + $0x1f8] sm:$0xff] %v1097
        %1226 = vst [vmem:[%s135 + $0x200] sm:$0xff] %v1098
        %1227 = vst [vmem:[%s135 + $0x208] sm:$0xff] %v1099
        %1228 = vst [vmem:[%s135 + $0x210] sm:$0xff] %v1100
        %1229 = vst [vmem:[%s135 + $0x218] sm:$0xff] %v1101
        %1230 = vst [vmem:[%s135 + $0x220] sm:$0xff] %v1102
        %1231 = vst [vmem:[%s135 + $0x228] sm:$0xff] %v1103
        %1232 = vst [vmem:[%s135 + $0x230] sm:$0xff] %v1104
        %1233 = vst [vmem:[%s135 + $0x238] sm:$0xff] %v1105
        %1234 = vst [vmem:[%s135 + $0x240] sm:$0xff] %v1106
        %1235 = vst [vmem:[%s135 + $0x248] sm:$0xff] %v1107
        %1236 = vst [vmem:[%s135 + $0x250] sm:$0xff] %v1108
        %1237 = vst [vmem:[%s135 + $0x258] sm:$0xff] %v1109
        %1238 = vst [vmem:[%s135 + $0x260] sm:$0xff] %v1110
        %1239 = vst [vmem:[%s135 + $0x268] sm:$0xff] %v1111
        %1240 = vst [vmem:[%s135 + $0x270] sm:$0xff] %v1112
        %1241 = vst [vmem:[%s135 + $0x278] sm:$0xff] %v1113
        %1242 = vst [vmem:[%s135 + $0x280] sm:$0xff] %v1114
        %1243 = vst [vmem:[%s135 + $0x288] sm:$0xff] %v1115
        %1244 = vst [vmem:[%s135 + $0x290] sm:$0xff] %v1116
        %1245 = vst [vmem:[%s135 + $0x298] sm:$0xff] %v1117
        %1246 = vst [vmem:[%s135 + $0x2a0] sm:$0xff] %v1118
        %1247 = vst [vmem:[%s135 + $0x2a8] sm:$0xff] %v1119
        %1248 = vst [vmem:[%s135 + $0x2b0] sm:$0xff] %v1120
        %1249 = vst [vmem:[%s135 + $0x2b8] sm:$0xff] %v1121
        %1250 = vst [vmem:[%s135 + $0x2c0] sm:$0xff] %v1122
        %1251 = vst [vmem:[%s135 + $0x2c8] sm:$0xff] %v1123
        %1252 = vst [vmem:[%s135 + $0x2d0] sm:$0xff] %v1124
        %1253 = vst [vmem:[%s135 + $0x2d8] sm:$0xff] %v1125
        %1254 = vst [vmem:[%s135 + $0x2e0] sm:$0xff] %v1126
        %1255 = vst [vmem:[%s135 + $0x2e8] sm:$0xff] %v1127
        %1256 = vst [vmem:[%s135 + $0x2f0] sm:$0xff] %v1128
        %1257 = vst [vmem:[%s135 + $0x2f8] sm:$0xff] %v1129
        %1258 = vst [vmem:[%s135 + $0x300] sm:$0xff] %v1130
        %1259 = vst [vmem:[%s135 + $0x308] sm:$0xff] %v1131
        %1260 = vst [vmem:[%s135 + $0x310] sm:$0xff] %v1132
        %1261 = vst [vmem:[%s135 + $0x318] sm:$0xff] %v1133
        %1262 = vst [vmem:[%s135 + $0x320] sm:$0xff] %v1134
        %1263 = vst [vmem:[%s135 + $0x328] sm:$0xff] %v1135
        %1264 = vst [vmem:[%s135 + $0x330] sm:$0xff] %v1136
        %1265 = vst [vmem:[%s135 + $0x338] sm:$0xff] %v1137
        %1266 = vst [vmem:[%s135 + $0x340] sm:$0xff] %v1138
        %1267 = vst [vmem:[%s135 + $0x348] sm:$0xff] %v1139
        %1268 = vst [vmem:[%s135 + $0x350] sm:$0xff] %v1140
        %1269 = vst [vmem:[%s135 + $0x358] sm:$0xff] %v1141
        %1270 = vst [vmem:[%s135 + $0x360] sm:$0xff] %v1142
        %1271 = vst [vmem:[%s135 + $0x368] sm:$0xff] %v1143
        %1272 = vst [vmem:[%s135 + $0x370] sm:$0xff] %v1144
        %1273 = vst [vmem:[%s135 + $0x378] sm:$0xff] %v1145
        %1274 = vst [vmem:[%s135 + $0x380] sm:$0xff] %v1146
        %1275 = vst [vmem:[%s135 + $0x388] sm:$0xff] %v1147
        %1276 = vst [vmem:[%s135 + $0x390] sm:$0xff] %v1148
        %1277 = vst [vmem:[%s135 + $0x398] sm:$0xff] %v1149
        %1278 = vst [vmem:[%s135 + $0x3a0] sm:$0xff] %v1150
        %1279 = vst [vmem:[%s135 + $0x3a8] sm:$0xff] %v1151
        %1280 = vst [vmem:[%s135 + $0x3b0] sm:$0xff] %v1152
        %1281 = vst [vmem:[%s135 + $0x3b8] sm:$0xff] %v1153
        %1282 = vst [vmem:[%s135 + $0x3c0] sm:$0xff] %v1154
        %1283 = vst [vmem:[%s135 + $0x3c8] sm:$0xff] %v1155
        %1284 = vst [vmem:[%s135 + $0x3d0] sm:$0xff] %v1156
        %1285 = vst [vmem:[%s135 + $0x3d8] sm:$0xff] %v1157
        %1286 = vst [vmem:[%s135 + $0x3e0] sm:$0xff] %v1158
        %1287 = vst [vmem:[%s135 + $0x3e8] sm:$0xff] %v1159
        %1288 = vst [vmem:[%s135 + $0x3f0] sm:$0xff] %v1160
        %1289 = vst [vmem:[%s135 + $0x3f8] sm:$0xff] %v1161
        %s1290 = sand.u32 %s52, 1
        %s1291 = scalar_lea.sflag [#allocation4], %s1290
        %s1292 = sand.u32 %s52, 1
        %s1293 = smul.addr %s1292, 1024
        %s1294 = scalar_lea.vmem [#allocation5], %s1293
        // Predicated region
        $region29: #{tpu_custom_call.1} parent=23 // pred_check
          %p1295 = pneg %p62
        $region30: #{tpu_custom_call.1} parent=23 // pred_check_branch
          %1297 = sbr.rel (%p1295) target = $region32
        $region31: #{tpu_custom_call.1} parent=23 // pred_region
          %s1298 = smul.u32 4, %s18
          %s1300 = ssub.s32 16384, 16384
          %1301 = vsyncadd %s1291, %s1300
          %s1302 = smul.addr %s1298, 32
          %s1303 = smul.addr %s1302, 128
          %s1304 = scalar_lea.hbm %s1, %s1303
          %s1305 = sshll.u32 %s1294, 4
          %s1306 = int_to_ptr.vmem [resolvable:$true] %s1305
          %1311 = dma.vmem_to_hbm [thread:$0]  %s1306, 16384, %s1304, %s1291, 4096, 4096, 256
        $region32: #{tpu_custom_call.1} parent=23 // pred_fallthru
          _
      $region24: #{tpu_custom_call.1} parent=5 // pred_fallthru
        _
      %p1312 = scmp.le.s32.totalorder 2, %s13
      // Predicated region
      $region33: #{tpu_custom_call.1} parent=5 // pred_check
        %p1313 = pneg %p1312
      $region34: #{tpu_custom_call.1} parent=5 // pred_check_branch
        %1315 = sbr.rel (%p1313) target = $region36
      $region35: #{tpu_custom_call.1} parent=5 // pred_region
        %s1316 = ssub.s32 %s13, 2
        // Predicated region
        $region37: #{tpu_custom_call.1} parent=35 // pred_check
          %p1317 = pneg %p68
        $region38: #{tpu_custom_call.1} parent=35 // pred_check_branch
          %1319 = sbr.rel (%p1317) target = $region40
        $region39: #{tpu_custom_call.1} parent=35 // pred_region
          %s1320 = sand.u32 %s53, 1
          %s1321 = scalar_lea.sflag [#allocation4], %s1320
          %s1322 = sand.u32 %s53, 1
          %s1323 = smul.addr %s1322, 1024
          %s1324 = scalar_lea.vmem [#allocation5], %s1323
          %1325 = dma.done %s1321, 16384
        $region40: #{tpu_custom_call.1} parent=35 // pred_fallthru
          _
      $region36: #{tpu_custom_call.1} parent=5 // pred_fallthru
        _
    $region6: #{tpu_custom_call.1} parent=1 // loop_footer
      %s17 = sadd.s32 1, %s13
    $region7: #{tpu_custom_call.1} parent=1 // loop_footer_branch
      %12 = sbr.rel target = $region3
    $region8: #{tpu_custom_call.1} parent=1 // loop_exit
      _
    %1326 = vsyncpa [#allocation3], 1
    %s1327 = scalar_lea.sflag [#allocation3], 1
    %1328 = vsyncpa %s1327, 1
    %1329 = vsyncpa [#allocation4], 1
    %s1330 = scalar_lea.sflag [#allocation4], 1
    %1331 = vsyncpa %s1330, 1

</llo_original>
